<compile_context>
chip_gen: v7x
topology: tpu7x:2x2x1
jax: 0.10.0
libtpu: 0.0.40
codegen_flags: <defaults>
</compile_context>

<pallas_src>
import jax
import jax.numpy as jnp
from jax.experimental import pallas as pl
from jax.experimental.pallas import tpu as pltpu

_MIB = 1024 * 1024


# ---------------------------------------------------------------------------
# Kernels
# ---------------------------------------------------------------------------

def _fused_kernel(x_ref, w_ref, rep_ref, attn_ref):
    """Whole (TB, S, H) row block resident in VMEM: single-pass softmax."""
    x = x_ref[...]                                                    # (TB, S, H)
    w = w_ref[...]                                                    # (1, H)

    # scores = relu(x @ w): contraction over H (lane reduce on VPU/XLU).
    scores = jnp.maximum(jnp.sum(x * w[:, None, :], axis=-1), 0.0)    # (TB, S)

    # Numerically-stable softmax over the sequence axis (lanes). Exact divide:
    # the approximate EUP reciprocal is not accurate enough for tight checks
    # and the divide is free in an HBM-bound kernel.
    m = jnp.max(scores, axis=-1, keepdims=True)                       # (TB, 1)
    e = jnp.exp(scores - m)                                           # (TB, S)
    attn = e / jnp.sum(e, axis=-1, keepdims=True)                     # (TB, S)
    attn_ref[...] = attn.astype(attn_ref.dtype)

    # representations = sum_s attn[b, s] * x[b, s, :]
    rep = jnp.sum(x * attn[:, :, None], axis=1)                       # (TB, H)
    rep_ref[...] = rep.astype(rep_ref.dtype)


def _stiled_kernel(x_ref, w_ref, rep_ref, attn_ref, m_sc, l_sc, acc_sc):
    """Online softmax over sequence tiles (for rows too large for VMEM).

    x_ref:    (TB, TS, H)  current sequence chunk
    rep_ref:  (TB, H)      resident across the S grid axis; written last step
    attn_ref: (TB, S)      resident across the S grid axis; raw scores are
                           stashed per chunk and normalized on the last step
    m_sc/l_sc:(TB, 1)      running max / running sum (f32)
    acc_sc:   (TB, H)      running unnormalized weighted sum (f32)
    """
    si = pl.program_id(1)
    ns = pl.num_programs(1)
    ts = x_ref.shape[1]

    @pl.when(si == 0)
    def _init():
        m_sc[...] = jnp.full_like(m_sc, -jnp.inf)
        l_sc[...] = jnp.zeros_like(l_sc)
        acc_sc[...] = jnp.zeros_like(acc_sc)

    x = x_ref[...]                                                    # (TB, TS, H)
    w = w_ref[...]                                                    # (1, H)
    s_tile = jnp.maximum(jnp.sum(x * w[:, None, :], axis=-1), 0.0)    # (TB, TS)
    s_tile = s_tile.astype(jnp.float32)

    # Stash raw scores into the resident attention block (normalized at end).
    # TS is picked as a multiple of 128 when possible, so the store is
    # lane-aligned; the start is statically a multiple of the chunk size.
    start = pl.multiple_of(si * ts, ts)
    attn_ref[:, pl.ds(start, ts)] = s_tile.astype(attn_ref.dtype)

    # Online-softmax update (flash-attention style).
    m_new = jnp.maximum(m_sc[...], jnp.max(s_tile, axis=-1, keepdims=True))
    alpha = jnp.exp(m_sc[...] - m_new)                                # (TB, 1)
    p = jnp.exp(s_tile - m_new)                                       # (TB, TS)
    l_sc[...] = alpha * l_sc[...] + jnp.sum(p, axis=-1, keepdims=True)
    acc_sc[...] = alpha * acc_sc[...] + jnp.sum(
        x.astype(jnp.float32) * p[:, :, None], axis=1)
    m_sc[...] = m_new

    @pl.when(si == ns - 1)
    def _finalize():
        inv_l = 1.0 / l_sc[...]                                       # exact divide
        rep_ref[...] = (acc_sc[...] * inv_l).astype(rep_ref.dtype)
        scores = attn_ref[...].astype(jnp.float32)                    # (TB, S)
        attn_ref[...] = (jnp.exp(scores - m_sc[...]) * inv_l).astype(attn_ref.dtype)


# ---------------------------------------------------------------------------
# Tile planning
# ---------------------------------------------------------------------------

def _vmem_capacity_bytes():
    try:
        return int(pltpu.get_tpu_info().vmem_capacity_bytes)
    except Exception:
        return None  # interpret mode / unknown hardware


def _x_tile_budget_bytes(vmem_cap):
    """Generation-aware x-tile budget.

    v7x (64 MiB physical VMEM/TC) -> 8 MiB; v5e/v6e (128 MiB physical) ->
    12 MiB (with an explicit vmem_limit_bytes overriding v5e's 16 MiB default
    scoped limit); unknown hardware / interpret mode -> conservative 4 MiB.
    """
    if vmem_cap is None:
        return 4 * _MIB
    return max(4 * _MIB, min(12 * _MIB, vmem_cap // 8))


def _largest_aligned_divisor(n, cap, align):
    """Largest divisor of n that is <= cap and a multiple of `align`,
    or n itself when cap >= n.  Returns None if no such divisor exists."""
    cap = min(n, cap)
    if cap >= n:
        return n
    d = (cap // align) * align
    while d >= align:
        if n % d == 0:
            return d
        d -= align
    return None


def _pick_batch_tile(B, cap_rows):
    # The batch tile sits in the sublane slot of the 2-D output blocks, so it
    # must be a multiple of 8 unless it covers the whole batch.
    return _largest_aligned_divisor(B, cap_rows, 8)


def _pick_seq_tile(S, cap_rows):
    # The sequence tile sits in the sublane slot of the x block (multiple of 8
    # or full S).  Prefer multiples of 128 so the raw-score stash into the
    # resident attention block stays lane-aligned.
    for align in (128, 8):
        ts = _largest_aligned_divisor(S, cap_rows, align)
        if ts is not None:
            return ts
    # TODO(synk): S with no multiple-of-8 divisor (e.g. prime S) would need
    # masked partial tiles; fall back to the full sequence (made explicit via
    # vmem_limit_bytes below).
    return S


def _plan_tiles(B, S, H, itemsize, budget):
    per_row = S * H * itemsize

    if per_row <= budget:
        cap = budget // per_row
        # Keep >= 2 grid steps (>= 4 for larger batches) so the pipeline
        # overlaps DMA-in of step i+1 with compute of i, and both v7x
        # TensorCores get work under dimension_semantics=("parallel", ...).
        if B >= 32:
            cap = min(cap, B // 4)
        elif B >= 16:
            cap = min(cap, B // 2)
        tb = _pick_batch_tile(B, max(1, cap))
        if tb is not None:
            return "fused", tb, S

    # Row block does not fit (or no valid batch tile): tile the sequence axis
    # and run the online-softmax kernel.
    tb = _pick_batch_tile(B, 8)
    if tb is None:
        tb = B
    ts_cap = max(1, budget // max(1, tb * H * itemsize))
    ts = _pick_seq_tile(S, ts_cap)
    return "stiled", tb, ts


def _vmem_limit_bytes(mode, S, H, itemsize, tb, ts, vmem_cap):
    """Scoped-VMEM limit from the full working set, not just the x tile."""
    x_tile = tb * ts * H * itemsize
    out_blocks = tb * H * itemsize + tb * S * itemsize
    w_bytes = H * itemsize
    scratch = tb * (H + 2) * 4 if mode == "stiled" else 0
    # 2x x tile (double buffering) + 2x x tile headroom for materialized
    # elementwise temporaries + double-buffered outputs + scratch + slack.
    limit = 4 * x_tile + 2 * out_blocks + 2 * w_bytes + scratch + 2 * _MIB
    limit = max(limit, 32 * _MIB)                 # never starve the compiler
    hard_cap = (3 * vmem_cap) // 4 if vmem_cap else 48 * _MIB
    return int(min(limit, hard_cap))


# ---------------------------------------------------------------------------
# Wrapper
# ---------------------------------------------------------------------------

def self_attention(x, attention_weights, *, budget_bytes=None):
    """x: (B, S, H), attention_weights: (H,).

    Returns (representations (B, H), attentions (B, S)), matching the PyTorch
    SelfAttention.forward (for B > 1, H > 1 the .squeeze() is a no-op).
    NOTE: for production sizes, pad S and H to multiples of 128 in the caller
    so the output blocks stay lane-dense (unmasked stores).
    """
    B, S, H = x.shape
    itemsize = jnp.dtype(x.dtype).itemsize
    vmem_cap = _vmem_capacity_bytes()
    budget = budget_bytes if budget_bytes is not None else _x_tile_budget_bytes(vmem_cap)

    mode, tb, ts = _plan_tiles(B, S, H, itemsize, budget)
    vmem_limit = _vmem_limit_bytes(mode, S, H, itemsize, tb, ts, vmem_cap)

    w2d = attention_weights.reshape(1, H)
    out_shape = (
        jax.ShapeDtypeStruct((B, H), x.dtype),
        jax.ShapeDtypeStruct((B, S), x.dtype),
    )

    if mode == "fused":
        return pl.pallas_call(
            _fused_kernel,
            out_shape=out_shape,
            grid_spec=pltpu.PrefetchScalarGridSpec(
                num_scalar_prefetch=0,
                grid=(B // tb,),
                in_specs=[
                    pl.BlockSpec((tb, S, H), lambda b: (b, 0, 0)),
                    pl.BlockSpec((1, H), lambda b: (0, 0)),
                ],
                out_specs=[
                    pl.BlockSpec((tb, H), lambda b: (b, 0)),   # representations
                    pl.BlockSpec((tb, S), lambda b: (b, 0)),   # attentions
                ],
            ),
            compiler_params=pltpu.CompilerParams(
                dimension_semantics=("parallel",),
                vmem_limit_bytes=vmem_limit,
            ),
        )(x, w2d)

    # S-tiled online-softmax path (rows too large for one VMEM block).
    return pl.pallas_call(
        _stiled_kernel,
        out_shape=out_shape,
        grid_spec=pltpu.PrefetchScalarGridSpec(
            num_scalar_prefetch=0,
            grid=(B // tb, S // ts),                   # reduction axis last
            in_specs=[
                pl.BlockSpec((tb, ts, H), lambda b, s: (b, s, 0)),
                pl.BlockSpec((1, H), lambda b, s: (0, 0)),
            ],
            out_specs=[
                pl.BlockSpec((tb, H), lambda b, s: (b, 0)),    # resident acc
                pl.BlockSpec((tb, S), lambda b, s: (b, 0)),    # resident acc
            ],
            scratch_shapes=[
                pltpu.VMEM((tb, 1), jnp.float32),   # running max
                pltpu.VMEM((tb, 1), jnp.float32),   # running sum
                pltpu.VMEM((tb, H), jnp.float32),   # weighted-sum accumulator
            ],
        ),
        compiler_params=pltpu.CompilerParams(
            dimension_semantics=("parallel", "arbitrary"),
            vmem_limit_bytes=vmem_limit,
        ),
    )(x, w2d)


def self_attention_ref(x, w):
    scores = jnp.maximum(jnp.einsum("bsh,h->bs", x, w), 0.0)
    attn = jax.nn.softmax(scores, axis=-1)
    rep = jnp.sum(x * attn[:, :, None], axis=1)
    return rep, attn


if __name__ == "__main__":
    key = jax.random.PRNGKey(0)
    kx, kw, kx2 = jax.random.split(key, 3)

    # Demo sizes consistent with the module: batch=2, seq=8, attention_size=32.
    B, S, H = 2, 8, 32
    x = jax.random.normal(kx, (B, S, H), dtype=jnp.float32)
    # nn.init.uniform_(attention_weights, -0.005, 0.005), deterministic
    attention_weights = jax.random.uniform(
        kw, (H,), dtype=jnp.float32, minval=-0.005, maxval=0.005)

    rep, attn = self_attention(x, attention_weights)
    rep = jax.block_until_ready(rep)
    attn = jax.block_until_ready(attn)
    rep_ref, attn_ref = self_attention_ref(x, attention_weights)
    assert jnp.allclose(rep, rep_ref, atol=1e-4, rtol=1e-4)
    assert jnp.allclose(attn, attn_ref, atol=1e-4, rtol=1e-4)

    # Exercise the S-tiled online-softmax path with a tiny forced budget so a
    # (B, S, H) row block "doesn't fit": ts = 128, grid = (1, 4).
    B2, S2, H2 = 2, 512, 32
    x2 = jax.random.normal(kx2, (B2, S2, H2), dtype=jnp.float32)
    rep2, attn2 = self_attention(x2, attention_weights, budget_bytes=32 * 1024)
    rep2 = jax.block_until_ready(rep2)
    attn2 = jax.block_until_ready(attn2)
    rep2_ref, attn2_ref = self_attention_ref(x2, attention_weights)
    assert jnp.allclose(rep2, rep2_ref, atol=1e-4, rtol=1e-4)
    assert jnp.allclose(attn2, attn2_ref, atol=1e-4, rtol=1e-4)

    print("KERNEL_OK")
</pallas_src>

<mosaic_0001>
module attributes {stable_mosaic.version = 11 : i64} {
  func.func @_fused_kernel(%arg0: i32, %arg1: memref<2x8x32xf32, #tpu.memory_space<vmem>>, %arg2: memref<1x32xf32, #tpu.memory_space<vmem>>, %arg3: memref<2x32xf32, #tpu.memory_space<vmem>>, %arg4: memref<2x8xf32, #tpu.memory_space<vmem>>) attributes {dimension_semantics = [#tpu.dimension_semantics<parallel>], iteration_bounds = array<i64: 1>, scalar_prefetch = 0 : i64, scratch_operands = 0 : i64, tpu.core_type = #tpu.core_type<tc>, window_params = [{transform_indices = @transform_0, window_bounds = array<i64: 2, 8, 32>}, {pipeline_mode = #tpu.pipeline_mode<synchronous>, transform_indices = @transform_1, window_bounds = array<i64: 1, 32>}, {transform_indices = @transform_2, window_bounds = array<i64: 2, 32>}, {transform_indices = @transform_3, window_bounds = array<i64: 2, 8>}]} {
    %c0 = arith.constant 0 : index
    %c0_0 = arith.constant 0 : index
    %c0_1 = arith.constant 0 : index
    %0 = vector.load %arg1[%c0, %c0_0, %c0_1] : memref<2x8x32xf32, #tpu.memory_space<vmem>>, vector<2x8x32xf32>
    %c0_2 = arith.constant 0 : index
    %c0_3 = arith.constant 0 : index
    %1 = vector.load %arg2[%c0_2, %c0_3] : memref<1x32xf32, #tpu.memory_space<vmem>>, vector<1x32xf32>
    %2 = vector.shape_cast %1 : vector<1x32xf32> to vector<1x1x32xf32>
    %3 = vector.broadcast %2 : vector<1x1x32xf32> to vector<2x8x32xf32>
    %4 = arith.mulf %0, %3 : vector<2x8x32xf32>
    %cst = arith.constant dense<0.000000e+00> : vector<2x8xf32>
    %5 = vector.multi_reduction <add>, %4, %cst [2] : vector<2x8x32xf32> to vector<2x8xf32>
    %cst_4 = arith.constant 0.000000e+00 : f32
    %6 = vector.broadcast %cst_4 : f32 to vector<2x8xf32>
    %7 = arith.maximumf %5, %6 : vector<2x8xf32>
    %cst_5 = arith.constant dense<0xFF800000> : vector<2xf32>
    %8 = vector.multi_reduction <maximumf>, %7, %cst_5 [1] : vector<2x8xf32> to vector<2xf32>
    %9 = vector.shape_cast %8 : vector<2xf32> to vector<2x1xf32>
    %10 = vector.broadcast %9 : vector<2x1xf32> to vector<2x8xf32>
    %11 = arith.subf %7, %10 : vector<2x8xf32>
    %12 = math.exp %11 : vector<2x8xf32>
    %cst_6 = arith.constant dense<0.000000e+00> : vector<2xf32>
    %13 = vector.multi_reduction <add>, %12, %cst_6 [1] : vector<2x8xf32> to vector<2xf32>
    %14 = vector.shape_cast %13 : vector<2xf32> to vector<2x1xf32>
    %15 = vector.broadcast %14 : vector<2x1xf32> to vector<2x8xf32>
    %16 = arith.divf %12, %15 : vector<2x8xf32>
    %c0_7 = arith.constant 0 : index
    %c0_8 = arith.constant 0 : index
    %17 = vector.load %arg4[%c0_7, %c0_8] : memref<2x8xf32, #tpu.memory_space<vmem>>, vector<2x8xf32>
    tpu.vector_store %arg4[%c0_7, %c0_8], %16 {strides = array<i32>} : memref<2x8xf32, #tpu.memory_space<vmem>>, vector<2x8xf32>,
    %18 = vector.shape_cast %16 : vector<2x8xf32> to vector<2x8x1xf32>
    %19 = vector.broadcast %18 : vector<2x8x1xf32> to vector<2x8x32xf32>
    %20 = arith.mulf %0, %19 : vector<2x8x32xf32>
    %cst_9 = arith.constant dense<0.000000e+00> : vector<2x32xf32>
    %21 = vector.multi_reduction <add>, %20, %cst_9 [1] : vector<2x8x32xf32> to vector<2x32xf32>
    %c0_10 = arith.constant 0 : index
    %c0_11 = arith.constant 0 : index
    %22 = vector.load %arg3[%c0_10, %c0_11] : memref<2x32xf32, #tpu.memory_space<vmem>>, vector<2x32xf32>
    tpu.vector_store %arg3[%c0_10, %c0_11], %21 {strides = array<i32>} : memref<2x32xf32, #tpu.memory_space<vmem>>, vector<2x32xf32>,
    return
  }
  func.func @transform_0(%arg0: i32) -> (i32, i32, i32) {
    %c0_i32 = arith.constant 0 : i32
    %c0_i32_0 = arith.constant 0 : i32
    %c0_i32_1 = arith.constant 0 : i32
    return %arg0, %c0_i32, %c0_i32_0 : i32, i32, i32
  }
  func.func @transform_1(%arg0: i32) -> (i32, i32) {
    %c0_i32 = arith.constant 0 : i32
    %c0_i32_0 = arith.constant 0 : i32
    %c0_i32_1 = arith.constant 0 : i32
    return %c0_i32, %c0_i32_0 : i32, i32
  }
  func.func @transform_2(%arg0: i32) -> (i32, i32) {
    %c0_i32 = arith.constant 0 : i32
    %c0_i32_0 = arith.constant 0 : i32
    return %arg0, %c0_i32 : i32, i32
  }
  func.func @transform_3(%arg0: i32) -> (i32, i32) {
    %c0_i32 = arith.constant 0 : i32
    %c0_i32_0 = arith.constant 0 : i32
    return %arg0, %c0_i32 : i32, i32
  }
}

</mosaic_0001>

<llo_original>
// kernel: tpu_custom_call.1
$region0: #{tpu_custom_call.1}
  #allocation0 [shape = 'u32[]', space=smem, size = 0x4, offset = 0x4, fixed_abs, tag = 'smem constant byte address 0x4 - core index']
  #allocation1 [shape = 'u32[144,128]{1,0:T(1,128)}', space=vmem, size = 0x12000, scoped, tag = 'internal scratch']
  %s0 = inlined_call_operand.hbm [shape: f32[2,8,32], index: 0, kind: input, shape index: {}]
  %s1 = inlined_call_operand.vmem [shape: f32[1,32], index: 1, kind: input, shape index: {}]
  %s2 = inlined_call_operand.hbm [shape: f32[2,32], index: 2, kind: output, shape index: {0}]
  %s3 = inlined_call_operand.hbm [shape: f32[2,8], index: 3, kind: output, shape index: {1}]
  %4 = xla_tuple %s2, %s3
  %s5 = sld [smem:[#allocation0]]
  $region30: #{tpu_custom_call.1} parent=0
    _
  %s7 = ssub.s32 1, %s5
  %s8 = scalar_select 0, %s7, %s5
  $region1: #{tpu_custom_call.1} parent=0
    #allocation2 [shape = 'u8[8192]{0}', space=vmem, size = 0x2000, scoped, tag = 'input window, operand 0, single buffered']
    #allocation3 [shape = 's32[1]{0}', space=sflag, size = 0x4, scoped, tag = 'scoped memory for tpu_custom_call.1']
    #allocation4 [shape = 's32[1]{0}', space=sflag, size = 0x4, scoped, tag = 'scoped memory for tpu_custom_call.1']
    #allocation5 [shape = 'u8[1024]{0}', space=vmem, size = 0x400, scoped, tag = 'output window, operand 0, single buffered']
    #allocation6 [shape = 'u8[1024]{0}', space=vmem, size = 0x400, scoped, tag = 'output window, operand 1, single buffered']
    #allocation7 [shape = 's32[1]{0}', space=sflag, size = 0x4, scoped, tag = 'scoped memory for tpu_custom_call.1']
    %9 = vsyncpa [#allocation3], 0
    %10 = vsyncpa [#allocation4], 0
    %11 = vsyncpa [#allocation7], 0
    // Predicated region
    $region2: #{tpu_custom_call.1} parent=1 // pred_check
      _
    $region3: #{tpu_custom_call.1} parent=1 // pred_check_branch
      %13 = sbr.rel (0) target = $region5
    $region4: #{tpu_custom_call.1} parent=1 // pred_region
      %s15 = ssub.s32 256, 256
      %16 = vsyncadd [#allocation3], %s15
      %s17 = sshll.u32 [#allocation2], 4
      %s18 = int_to_ptr.vmem [resolvable:$true] %s17
      %23 = dma.hbm_to_vmem [thread:$0]  %s0, 256, %s18, [#allocation3], 128, 128, 8
    $region5: #{tpu_custom_call.1} parent=1 // pred_fallthru
      _
    // Predicated region
    $region6: #{tpu_custom_call.1} parent=1 // pred_check
      _
    $region7: #{tpu_custom_call.1} parent=1 // pred_check_branch
      %25 = sbr.rel (0) target = $region9
    $region8: #{tpu_custom_call.1} parent=1 // pred_region
      _
    $region9: #{tpu_custom_call.1} parent=1 // pred_fallthru
      _
    // Predicated region
    $region10: #{tpu_custom_call.1} parent=1 // pred_check
      _
    $region11: #{tpu_custom_call.1} parent=1 // pred_check_branch
      %27 = sbr.rel (0) target = $region13
    $region12: #{tpu_custom_call.1} parent=1 // pred_region
      %28 = dma.done [#allocation3], 256
    $region13: #{tpu_custom_call.1} parent=1 // pred_fallthru
      _
    %v29 = vld [vmem:[#allocation2] sm:$0xff]
    %v30 = vld [vmem:[#allocation2 + $0x8] sm:$0xff]
    %v31 = vld [vmem:[%s1] sm:$0x1]
    %v33 = vlaneseq
    %v34 = vshrl.u32 %v33, 7
    %v35 = vsub.s32 0, %v34
    %v36 = vrot.slane %v31, %v35
    %v38 = vmul.f32 %v29, %v36
    %v39 = vmul.f32 %v30, %v36
    %vm40 = vcmask 261120
    %v41 = vsel %vm40, %v38, 0.0
    %42 = vadd.xlane.f32.xlu0 %v41
    %v43 = vpop.xlane.xlu0 %42
    %v44 = vsel %vm40, %v39, 0.0
    %45 = vadd.xlane.f32.xlu0 %v44
    %v46 = vpop.xlane.xlu0 %45
    %v47 = vmax.f32 %v43, 0.0
    %v48 = vmax.f32 %v46, 0.0
    %v51 = vlaneseq
    %v52 = vand.u32 %v51, 127
    %v53 = vlaneseq
    %v54 = vshrl.u32 %v53, 7
    %v55 = vsub.s32 %v52, %v54
    %v56 = vrot.slane %v47, %v55
    %v57 = vlaneseq
    %v58 = vshrl.u32 %v57, 7
    %v59 = vsub.s32 %v52, %v58
    %v60 = vrot.slane %v48, %v59
    %vm61 = vcmask 1041409
    %v62 = vsel %vm61, %v60, %v56
    %vm64 = vcmask 58368
    %v65 = vsel %vm64, %v62, -inf
    %66 = vmax.xlane.f32.xlu0 %v65
    %v67 = vpop.xlane.xlu0 %66
    %v69 = vlaneseq
    %v70 = vshrl.u32 %v69, 7
    %v71 = vsub.s32 0, %v70
    %v72 = vrot.slane %v67, %v71
    %v73 = vlaneseq
    %v74 = vshrl.u32 %v73, 7
    %v75 = vsub.s32 1, %v74
    %v76 = vrot.slane %v67, %v75
    %v79 = vsub.f32 %v47, %v72
    %v80 = vsub.f32 %v48, %v76
    %v81 = vmul.f32 %v79, 1.442695
    %v82 = vpow.pop %v81
    %v83 = vmul.f32 %v80, 1.442695
    %v84 = vpow.pop %v83
    %87 = vset.pattern.permute.xlu0 0
    %88 = vperm.xlu0 %87, %v82
    %v89 = vpop.permute.xlu0 %88
    %90 = vset.pattern.permute.xlu0 0
    %91 = vperm.xlu0 %90, %v84
    %v92 = vpop.permute.xlu0 %91
    %v93 = vlaneseq
    %v94 = vshrl.u32 %v93, 7
    %v95 = vsub.s32 %v52, %v94
    %v96 = vrot.slane %v89, %v95
    %v97 = vlaneseq
    %v98 = vshrl.u32 %v97, 7
    %v99 = vsub.s32 %v52, %v98
    %v100 = vrot.slane %v92, %v99
    %v101 = vsel %vm61, %v100, %v96
    %v103 = vsel %vm64, %v101, 0.0
    %104 = vadd.xlane.f32.xlu0 %v103
    %v105 = vpop.xlane.xlu0 %104
    %v107 = vlaneseq
    %v108 = vshrl.u32 %v107, 7
    %v109 = vsub.s32 0, %v108
    %v110 = vrot.slane %v105, %v109
    %v111 = vlaneseq
    %v112 = vshrl.u32 %v111, 7
    %v113 = vsub.s32 1, %v112
    %v114 = vrot.slane %v105, %v113
    %v117 = vrcp.pop %v110
    %v118 = vmul.f32 %v82, %v117
    %v119 = vrcp.pop %v114
    %v120 = vmul.f32 %v84, %v119
    %123 = vset.pattern.permute.xlu0 0
    %124 = vperm.xlu0 %123, %v118
    %v125 = vpop.permute.xlu0 %124
    %126 = vset.pattern.permute.xlu0 0
    %127 = vperm.xlu0 %126, %v120
    %v128 = vpop.permute.xlu0 %127
    %v129 = vlaneseq
    %v130 = vshrl.u32 %v129, 7
    %v131 = vsub.s32 %v52, %v130
    %v132 = vrot.slane %v125, %v131
    %v133 = vlaneseq
    %v134 = vshrl.u32 %v133, 7
    %v135 = vsub.s32 %v52, %v134
    %v136 = vrot.slane %v128, %v135
    %v137 = vsel %vm61, %v136, %v132
    %139 = vst.msk [vmem:[#allocation6] sm:$0x3] %vm64, %v137
    %v142 = vmul.f32 %v29, %v125
    %v143 = vmul.f32 %v30, %v128
    %v144 = vsel %vm40, %v142, 0.0
    %v145 = vrot.slane %v144, 4
    %v146 = vadd.f32 %v144, %v145
    %v147 = vrot.slane %v146, 2
    %v148 = vadd.f32 %v146, %v147
    %v149 = vrot.slane %v148, 1
    %v150 = vadd.f32 %v148, %v149
    %v151 = vsel %vm40, %v143, 0.0
    %v152 = vrot.slane %v151, 4
    %v153 = vadd.f32 %v151, %v152
    %v154 = vrot.slane %v153, 2
    %v155 = vadd.f32 %v153, %v154
    %v156 = vrot.slane %v155, 1
    %v157 = vadd.f32 %v155, %v156
    %v160 = vsel %vm61, %v157, %v150
    %vm162 = vcmask 254976
    %163 = vst.msk [vmem:[#allocation5] sm:$0x3] %vm162, %v160
    // Predicated region
    $region14: #{tpu_custom_call.1} parent=1 // pred_check
      _
    $region15: #{tpu_custom_call.1} parent=1 // pred_check_branch
      %165 = sbr.rel (0) target = $region17
    $region16: #{tpu_custom_call.1} parent=1 // pred_region
      %s167 = ssub.s32 32, 32
      %168 = vsyncadd [#allocation4], %s167
      %s170 = sshll.u32 [#allocation5], 4
      %s171 = int_to_ptr.vmem [resolvable:$true] %s170
      %173 = dma.vmem_to_hbm [thread:$0]  %s171, 32, %s2, [#allocation4]
    $region17: #{tpu_custom_call.1} parent=1 // pred_fallthru
      _
    // Predicated region
    $region18: #{tpu_custom_call.1} parent=1 // pred_check
      _
    $region19: #{tpu_custom_call.1} parent=1 // pred_check_branch
      %175 = sbr.rel (0) target = $region21
    $region20: #{tpu_custom_call.1} parent=1 // pred_region
      %s177 = ssub.s32 32, 32
      %178 = vsyncadd [#allocation7], %s177
      %s180 = sshll.u32 [#allocation6], 4
      %s181 = int_to_ptr.vmem [resolvable:$true] %s180
      %183 = dma.vmem_to_hbm [thread:$0]  %s181, 32, %s3, [#allocation7]
    $region21: #{tpu_custom_call.1} parent=1 // pred_fallthru
      _
    // Predicated region
    $region22: #{tpu_custom_call.1} parent=1 // pred_check
      _
    $region23: #{tpu_custom_call.1} parent=1 // pred_check_branch
      %185 = sbr.rel (0) target = $region25
    $region24: #{tpu_custom_call.1} parent=1 // pred_region
      %186 = dma.done [#allocation4], 32
    $region25: #{tpu_custom_call.1} parent=1 // pred_fallthru
      _
    // Predicated region
    $region26: #{tpu_custom_call.1} parent=1 // pred_check
      _
    $region27: #{tpu_custom_call.1} parent=1 // pred_check_branch
      %188 = sbr.rel (0) target = $region29
    $region28: #{tpu_custom_call.1} parent=1 // pred_region
      %189 = dma.done [#allocation7], 32
    $region29: #{tpu_custom_call.1} parent=1 // pred_fallthru
      _
    %190 = vsyncpa [#allocation3], 1
    %191 = vsyncpa [#allocation4], 1
    %192 = vsyncpa [#allocation7], 1

</llo_original>
